<compile_context>
chip_gen: v6e
topology: v6e:2x2x1
jax: 0.10.0
libtpu: 0.0.40
codegen_flags: <defaults>
</compile_context>

<pallas_src>
import functools

import numpy as np

import jax
import jax.numpy as jnp
from jax.experimental import pallas as pl
from jax.experimental.pallas import tpu as pltpu


def _pooled_dim(d: int) -> int:
    # PyTorch AvgPool2d(kernel=3, stride=2, padding=1) output size (floor mode).
    return (d + 2 - 3) // 2 + 1


def _pool_matrix_np(out_dim: int, in_dim: int) -> np.ndarray:
    """0/1 matrix M (out_dim, in_dim); M[i, h] = 1 iff h in {2i-1, 2i, 2i+1} (valid rows)."""
    rows = np.arange(out_dim)[:, None]
    cols = np.arange(in_dim)[None, :]
    return (np.abs(cols - 2 * rows) <= 1).astype(np.float32)


def _combined_pool_matrices(H: int, W: int, ratio: int):
    """A_comb (Hf, H), B_comb (W, Wf) integer-count matrices (scale NOT folded)."""
    A = np.eye(H, dtype=np.float32)
    B = np.eye(W, dtype=np.float32)
    h, w = H, W
    for _ in range(ratio):
        ho, wo = _pooled_dim(h), _pooled_dim(w)
        A = _pool_matrix_np(ho, h) @ A        # (ho, H)
        B = B @ _pool_matrix_np(wo, w).T      # (W, wo)
        h, w = ho, wo
    return A, B, h, w


def _vmem_limit_bytes() -> int:
    """Generation-aware scoped-VMEM limit (conservative default = v7x's 64 MiB)."""
    try:
        cap = int(pltpu.get_tpu_info().vmem_capacity_bytes)
    except Exception:
        cap = 64 * 1024 * 1024
    return (100 << 20) if cap >= (128 << 20) else (48 << 20)


def _choose_planes_per_step(nc: int, plane_bytes: int, tile_budget: int) -> int:
    """Planes per grid step: big tiles for HBM BW, even grid for v7x's 2 TCs."""
    cap = max(1, tile_budget // max(plane_bytes, 1))
    if cap >= nc:
        # Whole batch fits in one step; split into 2 even steps only when there is
        # enough work to feed both v7x TensorCores.
        if nc >= 2 and nc * plane_bytes >= (2 << 20):
            return pl.cdiv(nc, 2)
        return nc
    steps = pl.cdiv(nc, cap)
    if steps > 1 and steps % 2 == 1:        # even split across the 2 TensorCores
        steps += 1
    return max(1, pl.cdiv(nc, steps))


def _fused_pool_kernel(x_ref, a_ref, b_ref, o_ref, *, planes, merged, scale):
    # x_ref: (TC, H, W)   a_ref: (Hf, H) counts   b_ref: (W, Wf) counts
    # o_ref: (TC, Hf, Wf)
    a = a_ref[...]
    b = b_ref[...]
    hf, h = a.shape
    w, wf = b.shape

    if merged:
        # One large MXU matmul: M = planes*H rows (layout-free reshape, H % sublane == 0).
        x2 = x_ref[...].reshape(planes * h, w)
        t = jnp.dot(x2, b, preferred_element_type=jnp.float32)       # (planes*H, Wf)
        t3 = t.reshape(planes, h, wf)
    else:
        # H not sublane-aligned: avoid the relayout-inducing reshape; still a single
        # batched matmul (no per-plane Python unroll).
        bb = jnp.broadcast_to(b, (planes, w, wf))
        t3 = jnp.einsum('phw,pwf->phf', x_ref[...], bb,
                        preferred_element_type=jnp.float32)          # (planes, H, Wf)

    # A-side as one batched matmul over all planes (A broadcast is tiny vs the X tile).
    ab = jnp.broadcast_to(a, (planes, hf, h))
    out = jnp.einsum('pih,phf->pif', ab, t3,
                     preferred_element_type=jnp.float32)             # (planes, Hf, Wf)

    # Apply the averaging scale once on the small output (keeps A/B as exact counts,
    # which keeps the big matmul on the bf16 MXU path for bf16 inputs).
    o_ref[...] = (out * scale).astype(o_ref.dtype)


def input_injection_forward(x: jnp.ndarray, ratio: int) -> jnp.ndarray:
    """Fused chain of `ratio` AvgPool2d(3, stride=2, padding=1) ops, NCHW."""
    if ratio == 0:
        return x
    N, C, H, W = x.shape
    A_np, B_np, Hf, Wf = _combined_pool_matrices(H, W, ratio)

    # Integer window counts are exact in bf16 for ratio <= 5 (counts <= 243); keeping
    # A/B in the input dtype avoids promoting the big X tile to f32 on the MXU.
    itemsize = jnp.dtype(x.dtype).itemsize
    if x.dtype == jnp.bfloat16 and ratio <= 5:
        mat_dtype = jnp.bfloat16
    else:
        mat_dtype = jnp.float32
    A = jnp.asarray(A_np, dtype=mat_dtype)
    B = jnp.asarray(B_np, dtype=mat_dtype)

    nc = N * C
    xf = x.reshape(nc, H, W)

    vmem_limit = _vmem_limit_bytes()
    tile_budget = vmem_limit // 5           # input tile per buffer; leaves room for
                                            # double-buffering + intermediates
    plane_bytes = H * W * itemsize
    tc = _choose_planes_per_step(nc, plane_bytes, tile_budget)
    grid = (pl.cdiv(nc, tc),)

    # The (TC,H,W)->(TC*H,W) reshape is layout-free only when H is a multiple of the
    # sublane pack (8 for f32, 16 for bf16); otherwise use the unmerged batched path.
    sublane = max(8, 32 // itemsize)
    merged = (H % sublane == 0)

    kernel = functools.partial(
        _fused_pool_kernel, planes=tc, merged=merged,
        scale=float((1.0 / 9.0) ** ratio))

    flops = 2 * nc * H * Wf * (W + Hf)
    bytes_accessed = (nc * H * W * itemsize + nc * Hf * Wf * itemsize
                      + A.size * A.dtype.itemsize + B.size * B.dtype.itemsize)

    out = pl.pallas_call(
        kernel,
        out_shape=jax.ShapeDtypeStruct((nc, Hf, Wf), x.dtype),
        grid=grid,
        in_specs=[
            pl.BlockSpec((tc, H, W), lambda i: (i, 0, 0)),
            pl.BlockSpec((Hf, H), lambda i: (0, 0)),
            pl.BlockSpec((W, Wf), lambda i: (0, 0)),
        ],
        out_specs=pl.BlockSpec((tc, Hf, Wf), lambda i: (i, 0, 0)),
        compiler_params=pltpu.CompilerParams(
            dimension_semantics=("parallel",),
            vmem_limit_bytes=vmem_limit,
        ),
        cost_estimate=pl.CostEstimate(
            flops=flops, transcendentals=0, bytes_accessed=bytes_accessed),
    )(xf, A, B)
    return out.reshape(N, C, Hf, Wf)


class InputInjection:
    """JAX/Pallas equivalent of the PyTorch InputInjection module (no parameters)."""

    def __init__(self, ratio: int):
        self.ratio = ratio

    def __call__(self, x: jnp.ndarray) -> jnp.ndarray:
        return input_injection_forward(x, self.ratio)


def _reference(x: jnp.ndarray, ratio: int) -> jnp.ndarray:
    """Pure-JAX reference using reduce_window (count_include_pad=True => /9 per stage)."""
    for _ in range(ratio):
        s = jax.lax.reduce_window(
            x.astype(jnp.float32), 0.0, jax.lax.add,
            window_dimensions=(1, 1, 3, 3),
            window_strides=(1, 1, 2, 2),
            padding=((0, 0), (0, 0), (1, 1), (1, 1)),
        )
        x = (s / 9.0).astype(x.dtype)
    return x


if __name__ == "__main__":
    key = jax.random.PRNGKey(0)
    N, C, H, W = 2, 4, 16, 16
    ratio = 2
    x = jax.random.normal(key, (N, C, H, W), dtype=jnp.float32)

    mod = InputInjection(ratio)
    fwd = jax.jit(lambda v: mod(v))
    out = jax.block_until_ready(fwd(x))

    ref = _reference(x, ratio)
    assert out.shape == (N, C, H // (2 ** ratio), W // (2 ** ratio)), out.shape
    assert jnp.allclose(out, ref, atol=1e-5, rtol=1e-5), "mismatch vs reference"

    print("KERNEL_OK")
</pallas_src>

<mosaic_0001>
module attributes {stable_mosaic.version = 11 : i64} {
  func.func @_fused_pool_kernel(%arg0: i32, %arg1: memref<8x16x16xf32, #tpu.memory_space<vmem>>, %arg2: memref<4x16xf32, #tpu.memory_space<vmem>>, %arg3: memref<16x4xf32, #tpu.memory_space<vmem>>, %arg4: memref<8x4x4xf32, #tpu.memory_space<vmem>>) attributes {dimension_semantics = [#tpu.dimension_semantics<parallel>], iteration_bounds = array<i64: 1>, scalar_prefetch = 0 : i64, scratch_operands = 0 : i64, tpu.core_type = #tpu.core_type<tc>, window_params = [{transform_indices = @transform_0, window_bounds = array<i64: 8, 16, 16>}, {pipeline_mode = #tpu.pipeline_mode<synchronous>, transform_indices = @transform_1, window_bounds = array<i64: 4, 16>}, {pipeline_mode = #tpu.pipeline_mode<synchronous>, transform_indices = @transform_2, window_bounds = array<i64: 16, 4>}, {transform_indices = @transform_3, window_bounds = array<i64: 8, 4, 4>}]} {
    %c0 = arith.constant 0 : index
    %c0_0 = arith.constant 0 : index
    %0 = vector.load %arg2[%c0, %c0_0] : memref<4x16xf32, #tpu.memory_space<vmem>>, vector<4x16xf32>
    %c0_1 = arith.constant 0 : index
    %c0_2 = arith.constant 0 : index
    %1 = vector.load %arg3[%c0_1, %c0_2] : memref<16x4xf32, #tpu.memory_space<vmem>>, vector<16x4xf32>
    %c0_3 = arith.constant 0 : index
    %c0_4 = arith.constant 0 : index
    %c0_5 = arith.constant 0 : index
    %2 = vector.load %arg1[%c0_3, %c0_4, %c0_5] : memref<8x16x16xf32, #tpu.memory_space<vmem>>, vector<8x16x16xf32>
    %3 = vector.shape_cast %2 : vector<8x16x16xf32> to vector<128x16xf32>
    %cst = arith.constant dense<0.000000e+00> : vector<128x4xf32>
    %4 = tpu.matmul %3, %1, %cst {dimension_numbers = #tpu.dot_dimension_numbers<[1], [0], [0], [1], [0, 0, 1, 1], [], []>} : vector<128x16xf32>, vector<16x4xf32>, vector<128x4xf32> -> vector<128x4xf32>
    %5 = vector.shape_cast %4 : vector<128x4xf32> to vector<8x16x4xf32>
    %6 = vector.shape_cast %0 : vector<4x16xf32> to vector<1x4x16xf32>
    %7 = vector.broadcast %6 : vector<1x4x16xf32> to vector<8x4x16xf32>
    "tpu.trace_start"() <{level = 10 : i32, message = "pih,phf->pif"}> : () -> ()
    %cst_6 = arith.constant dense<0.000000e+00> : vector<8x4x4xf32>
    %8 = tpu.matmul %7, %5, %cst_6 {dimension_numbers = #tpu.dot_dimension_numbers<[2], [1], [1], [2], [0, 0, 0, 1, 1, 2], [0], [0]>} : vector<8x4x16xf32>, vector<8x16x4xf32>, vector<8x4x4xf32> -> vector<8x4x4xf32>
    "tpu.trace_stop"() : () -> ()
    %cst_7 = arith.constant 0.0123456791 : f32
    %9 = vector.broadcast %cst_7 : f32 to vector<8x4x4xf32>
    %10 = arith.mulf %8, %9 : vector<8x4x4xf32>
    %c0_8 = arith.constant 0 : index
    %c0_9 = arith.constant 0 : index
    %c0_10 = arith.constant 0 : index
    %11 = vector.load %arg4[%c0_8, %c0_9, %c0_10] : memref<8x4x4xf32, #tpu.memory_space<vmem>>, vector<8x4x4xf32>
    tpu.vector_store %arg4[%c0_8, %c0_9, %c0_10], %10 {strides = array<i32>} : memref<8x4x4xf32, #tpu.memory_space<vmem>>, vector<8x4x4xf32>,
    return
  }
  func.func @transform_0(%arg0: i32) -> (i32, i32, i32) {
    %c0_i32 = arith.constant 0 : i32
    %c0_i32_0 = arith.constant 0 : i32
    %c0_i32_1 = arith.constant 0 : i32
    return %arg0, %c0_i32, %c0_i32_0 : i32, i32, i32
  }
  func.func @transform_1(%arg0: i32) -> (i32, i32) {
    %c0_i32 = arith.constant 0 : i32
    %c0_i32_0 = arith.constant 0 : i32
    %c0_i32_1 = arith.constant 0 : i32
    return %c0_i32, %c0_i32_0 : i32, i32
  }
  func.func @transform_2(%arg0: i32) -> (i32, i32) {
    %c0_i32 = arith.constant 0 : i32
    %c0_i32_0 = arith.constant 0 : i32
    %c0_i32_1 = arith.constant 0 : i32
    return %c0_i32, %c0_i32_0 : i32, i32
  }
  func.func @transform_3(%arg0: i32) -> (i32, i32, i32) {
    %c0_i32 = arith.constant 0 : i32
    %c0_i32_0 = arith.constant 0 : i32
    %c0_i32_1 = arith.constant 0 : i32
    return %arg0, %c0_i32, %c0_i32_0 : i32, i32, i32
  }
}

</mosaic_0001>

<llo_original>
// kernel: _lambda_.1
$region0: #{_lambda_.1}
  #allocation0 [shape = 'u32[]', space=smem, size = 0x4, offset = 0x4, fixed_abs, tag = 'smem constant byte address 0x4 - core index']
  #allocation1 [shape = 'u32[144,128]{1,0:T(1,128)}', space=vmem, size = 0x12000, scoped, tag = 'internal scratch']
  %s0 = inlined_call_operand.hbm [shape: f32[8,16,16], index: 0, kind: input, shape index: {}]
  %s1 = inlined_call_operand.hbm [shape: f32[4,16], index: 1, kind: input, shape index: {}]
  %s2 = inlined_call_operand.hbm [shape: f32[16,4], index: 2, kind: input, shape index: {}]
  %s3 = inlined_call_operand.hbm [shape: f32[8,4,4], index: 3, kind: output, shape index: {}]
  %s4 = sld [smem:[#allocation0]]
  $region34: #{_lambda_.1} parent=0
    _
  %s6 = ssub.s32 1, %s4
  %s7 = scalar_select 0, %s6, %s4
  $region1: #{_lambda_.1} parent=0
    #allocation2 [shape = 'u8[65536]{0}', space=vmem, size = 0x10000, scoped, tag = 'input window, operand 0, single buffered']
    #allocation3 [shape = 's32[1]{0}', space=sflag, size = 0x4, scoped, tag = 'scoped memory for _lambda_.1']
    #allocation4 [shape = 's32[1]{0}', space=sflag, size = 0x4, scoped, tag = 'scoped memory for _lambda_.1']
    #allocation5 [shape = 'u8[2048]{0}', space=vmem, size = 0x800, scoped, tag = 'input window, operand 1, single buffered']
    #allocation6 [shape = 's32[1]{0}', space=sflag, size = 0x4, scoped, tag = 'scoped memory for _lambda_.1']
    #allocation7 [shape = 'u8[8192]{0}', space=vmem, size = 0x2000, scoped, tag = 'input window, operand 2, single buffered']
    #allocation8 [shape = 'u8[16384]{0}', space=vmem, size = 0x4000, scoped, tag = 'output window, operand 0, single buffered']
    %8 = vsyncpa [#allocation3], 0
    %9 = vsyncpa [#allocation6], 0
    %10 = vsyncpa [#allocation4], 0
    // Predicated region
    $region2: #{_lambda_.1} parent=1 // pred_check
      _
    $region3: #{_lambda_.1} parent=1 // pred_check_branch
      %12 = sbr.rel (0) target = $region5
    $region4: #{_lambda_.1} parent=1 // pred_region
      %s14 = ssub.s32 2048, 2048
      %15 = vsyncadd [#allocation3], %s14
      %s16 = sshll.u32 [#allocation2], 4
      %s17 = int_to_ptr.vmem [resolvable:$true] %s16
      %22 = dma.hbm_to_vmem [thread:$0]  %s0, 2048, %s17, [#allocation3], 128, 128, 8
    $region5: #{_lambda_.1} parent=1 // pred_fallthru
      _
    // Predicated region
    $region6: #{_lambda_.1} parent=1 // pred_check
      _
    $region7: #{_lambda_.1} parent=1 // pred_check_branch
      %24 = sbr.rel (0) target = $region9
    $region8: #{_lambda_.1} parent=1 // pred_region
      %s26 = ssub.s32 64, 64
      %27 = vsyncadd [#allocation6], %s26
      %s29 = sshll.u32 [#allocation5], 4
      %s30 = int_to_ptr.vmem [resolvable:$true] %s29
      %32 = dma.hbm_to_vmem [thread:$0]  %s1, 64, %s30, [#allocation6]
    $region9: #{_lambda_.1} parent=1 // pred_fallthru
      _
    // Predicated region
    $region10: #{_lambda_.1} parent=1 // pred_check
      _
    $region11: #{_lambda_.1} parent=1 // pred_check_branch
      %34 = sbr.rel (0) target = $region13
    $region12: #{_lambda_.1} parent=1 // pred_region
      %s36 = ssub.s32 256, 256
      %37 = vsyncadd [#allocation6], %s36
      %s38 = sshll.u32 [#allocation7], 4
      %s39 = int_to_ptr.vmem [resolvable:$true] %s38
      %44 = dma.hbm_to_vmem [thread:$0]  %s2, 256, %s39, [#allocation6], 128, 128, 8
    $region13: #{_lambda_.1} parent=1 // pred_fallthru
      _
    // Predicated region
    $region14: #{_lambda_.1} parent=1 // pred_check
      _
    $region15: #{_lambda_.1} parent=1 // pred_check_branch
      %46 = sbr.rel (0) target = $region17
    $region16: #{_lambda_.1} parent=1 // pred_region
      %47 = dma.done [#allocation3], 2048
    $region17: #{_lambda_.1} parent=1 // pred_fallthru
      _
    // Predicated region
    $region18: #{_lambda_.1} parent=1 // pred_check
      _
    $region19: #{_lambda_.1} parent=1 // pred_check_branch
      %49 = sbr.rel (0) target = $region21
    $region20: #{_lambda_.1} parent=1 // pred_region
      %50 = dma.done [#allocation6], 64
    $region21: #{_lambda_.1} parent=1 // pred_fallthru
      _
    // Predicated region
    $region22: #{_lambda_.1} parent=1 // pred_check
      _
    $region23: #{_lambda_.1} parent=1 // pred_check_branch
      %52 = sbr.rel (0) target = $region25
    $region24: #{_lambda_.1} parent=1 // pred_region
      %53 = dma.done [#allocation6], 256
    $region25: #{_lambda_.1} parent=1 // pred_fallthru
      _
    %v54 = vld [vmem:[#allocation5] sm:$0xf]
    %v55 = vld [vmem:[#allocation7] sm:$0xff]
    %v56 = vld [vmem:[#allocation7 + $0x8] sm:$0xff]
    %v57 = vld [vmem:[#allocation2] sm:$0xff]
    %v58 = vld [vmem:[#allocation2 + $0x8] sm:$0xff]
    %v59 = vld [vmem:[#allocation2 + $0x10] sm:$0xff]
    %v60 = vld [vmem:[#allocation2 + $0x18] sm:$0xff]
    %v61 = vld [vmem:[#allocation2 + $0x20] sm:$0xff]
    %v62 = vld [vmem:[#allocation2 + $0x28] sm:$0xff]
    %v63 = vld [vmem:[#allocation2 + $0x30] sm:$0xff]
    %v64 = vld [vmem:[#allocation2 + $0x38] sm:$0xff]
    %v65 = vld [vmem:[#allocation2 + $0x40] sm:$0xff]
    %v66 = vld [vmem:[#allocation2 + $0x48] sm:$0xff]
    %v67 = vld [vmem:[#allocation2 + $0x50] sm:$0xff]
    %v68 = vld [vmem:[#allocation2 + $0x58] sm:$0xff]
    %v69 = vld [vmem:[#allocation2 + $0x60] sm:$0xff]
    %v70 = vld [vmem:[#allocation2 + $0x68] sm:$0xff]
    %v71 = vld [vmem:[#allocation2 + $0x70] sm:$0xff]
    %v72 = vld [vmem:[#allocation2 + $0x78] sm:$0xff]
    %vm73 = vcmask 130048
    %v75 = vsel %vm73, %v57, 0
    %v78 = vsel %vm73, %v58, 0
    %v81 = vsel %vm73, %v59, 0
    %v84 = vsel %vm73, %v60, 0
    %v87 = vsel %vm73, %v61, 0
    %v90 = vsel %vm73, %v62, 0
    %v93 = vsel %vm73, %v63, 0
    %v96 = vsel %vm73, %v64, 0
    %v99 = vsel %vm73, %v65, 0
    %v102 = vsel %vm73, %v66, 0
    %v105 = vsel %vm73, %v67, 0
    %v108 = vsel %vm73, %v68, 0
    %v111 = vsel %vm73, %v69, 0
    %v114 = vsel %vm73, %v70, 0
    %v117 = vsel %vm73, %v71, 0
    %v120 = vsel %vm73, %v72, 0
    %122 = vmatprep.subr.mxu0 0.0
    %123 = vmatpush1.msra.mxu0 0.0
    %124 = vmatprep.subr.mxu0 0.0
    %125 = vmatpush1.msra.mxu0 0.0
    %126 = vmatprep.subr.mxu0 0.0
    %127 = vmatpush1.msra.mxu0 0.0
    %128 = vmatprep.subr.mxu0 0.0
    %129 = vmatpush1.msra.mxu0 0.0
    %130 = vmatprep.subr.mxu0 0.0
    %131 = vmatpush1.msra.mxu0 0.0
    %132 = vmatprep.subr.mxu0 0.0
    %133 = vmatpush1.msra.mxu0 0.0
    %134 = vmatprep.subr.mxu0 0.0
    %135 = vmatpush1.msra.mxu0 0.0
    %136 = vmatprep.subr.mxu0 0.0
    %137 = vmatpush1.msra.mxu0 0.0
    %138 = vmatprep.subr.mxu0 0.0
    %139 = vmatpush1.msra.mxu0 0.0
    %140 = vmatprep.subr.mxu0 0.0
    %141 = vmatpush1.msra.mxu0 0.0
    %142 = vmatprep.subr.mxu0 0.0
    %143 = vmatpush1.msra.mxu0 0.0
    %144 = vmatprep.subr.mxu0 0.0
    %145 = vmatpush1.msra.mxu0 0.0
    %146 = vmatprep.subr.mxu0 0.0
    %147 = vmatpush1.msra.mxu0 0.0
    %148 = vmatprep.subr.mxu0 0.0
    %149 = vmatpush1.msra.mxu0 0.0
    %150 = vmatprep.subr.mxu0 0.0
    %151 = vmatpush1.msra.mxu0 %v56
    %152 = vmatprep.subr.mxu0 0.0
    %153 = vmatpush1.msra.mxu0 %v55
    %154 = vmatprep.subr.mxu0 0.0
    %155 = vmatpush2.msra.mxu0 0.0
    %156 = vmatprep.subr.mxu0 0.0
    %157 = vmatpush2.msra.mxu0 0.0
    %158 = vmatprep.subr.mxu0 0.0
    %159 = vmatpush2.msra.mxu0 0.0
    %160 = vmatprep.subr.mxu0 0.0
    %161 = vmatpush2.msra.mxu0 0.0
    %162 = vmatprep.subr.mxu0 0.0
    %163 = vmatpush2.msra.mxu0 0.0
    %164 = vmatprep.subr.mxu0 0.0
    %165 = vmatpush2.msra.mxu0 0.0
    %166 = vmatprep.subr.mxu0 0.0
    %167 = vmatpush2.msra.mxu0 0.0
    %168 = vmatprep.subr.mxu0 0.0
    %169 = vmatpush2.msra.mxu0 0.0
    %170 = vmatprep.subr.mxu0 0.0
    %171 = vmatpush2.msra.mxu0 0.0
    %172 = vmatprep.subr.mxu0 0.0
    %173 = vmatpush2.msra.mxu0 0.0
    %174 = vmatprep.subr.mxu0 0.0
    %175 = vmatpush2.msra.mxu0 0.0
    %176 = vmatprep.subr.mxu0 0.0
    %177 = vmatpush2.msra.mxu0 0.0
    %178 = vmatprep.subr.mxu0 0.0
    %179 = vmatpush2.msra.mxu0 0.0
    %180 = vmatprep.subr.mxu0 0.0
    %181 = vmatpush2.msra.mxu0 0.0
    %182 = vmatprep.subr.mxu0 0.0
    %183 = vmatpush2.msra.mxu0 0.0
    %184 = vmatprep.subr.mxu0 0.0
    %185 = vmatpush2.msra.mxu0 0.0
    %186 = vmatprep.mubr.f32.mxu0 0.0
    %187 = vmatmul.mubr.f32.gmra.mxu0 %v75
    %v188 = vpop.f32.mrf.mxu0
    %v189 = vadd.f32 0.0, %v188
    %v190 = vpop.f32.mrf.mxu0
    %191 = vmatprep.mubr.f32.mxu0 0.0
    %192 = vmatmul.mubr.f32.gmra.mxu0 %v78
    %v193 = vpop.f32.mrf.mxu0
    %v194 = vadd.f32 0.0, %v193
    %v195 = vpop.f32.mrf.mxu0
    %196 = vmatprep.mubr.f32.mxu0 0.0
    %197 = vmatmul.mubr.f32.gmra.mxu0 %v81
    %v198 = vpop.f32.mrf.mxu0
    %v199 = vadd.f32 0.0, %v198
    %v200 = vpop.f32.mrf.mxu0
    %201 = vmatprep.mubr.f32.mxu0 0.0
    %202 = vmatmul.mubr.f32.gmra.mxu0 %v84
    %v203 = vpop.f32.mrf.mxu0
    %v204 = vadd.f32 0.0, %v203
    %v205 = vpop.f32.mrf.mxu0
    %206 = vmatprep.mubr.f32.mxu0 0.0
    %207 = vmatmul.mubr.f32.gmra.mxu0 %v87
    %v208 = vpop.f32.mrf.mxu0
    %v209 = vadd.f32 0.0, %v208
    %v210 = vpop.f32.mrf.mxu0
    %211 = vmatprep.mubr.f32.mxu0 0.0
    %212 = vmatmul.mubr.f32.gmra.mxu0 %v90
    %v213 = vpop.f32.mrf.mxu0
    %v214 = vadd.f32 0.0, %v213
    %v215 = vpop.f32.mrf.mxu0
    %216 = vmatprep.mubr.f32.mxu0 0.0
    %217 = vmatmul.mubr.f32.gmra.mxu0 %v93
    %v218 = vpop.f32.mrf.mxu0
    %v219 = vadd.f32 0.0, %v218
    %v220 = vpop.f32.mrf.mxu0
    %221 = vmatprep.mubr.f32.mxu0 0.0
    %222 = vmatmul.mubr.f32.gmra.mxu0 %v96
    %v223 = vpop.f32.mrf.mxu0
    %v224 = vadd.f32 0.0, %v223
    %v225 = vpop.f32.mrf.mxu0
    %226 = vmatprep.mubr.f32.mxu0 0.0
    %227 = vmatmul.mubr.f32.gmra.mxu0 %v99
    %v228 = vpop.f32.mrf.mxu0
    %v229 = vadd.f32 0.0, %v228
    %v230 = vpop.f32.mrf.mxu0
    %231 = vmatprep.mubr.f32.mxu0 0.0
    %232 = vmatmul.mubr.f32.gmra.mxu0 %v102
    %v233 = vpop.f32.mrf.mxu0
    %v234 = vadd.f32 0.0, %v233
    %v235 = vpop.f32.mrf.mxu0
    %236 = vmatprep.mubr.f32.mxu0 0.0
    %237 = vmatmul.mubr.f32.gmra.mxu0 %v105
    %v238 = vpop.f32.mrf.mxu0
    %v239 = vadd.f32 0.0, %v238
    %v240 = vpop.f32.mrf.mxu0
    %241 = vmatprep.mubr.f32.mxu0 0.0
    %242 = vmatmul.mubr.f32.gmra.mxu0 %v108
    %v243 = vpop.f32.mrf.mxu0
    %v244 = vadd.f32 0.0, %v243
    %v245 = vpop.f32.mrf.mxu0
    %246 = vmatprep.mubr.f32.mxu0 0.0
    %247 = vmatmul.mubr.f32.gmra.mxu0 %v111
    %v248 = vpop.f32.mrf.mxu0
    %v249 = vadd.f32 0.0, %v248
    %v250 = vpop.f32.mrf.mxu0
    %251 = vmatprep.mubr.f32.mxu0 0.0
    %252 = vmatmul.mubr.f32.gmra.mxu0 %v114
    %v253 = vpop.f32.mrf.mxu0
    %v254 = vadd.f32 0.0, %v253
    %v255 = vpop.f32.mrf.mxu0
    %256 = vmatprep.mubr.f32.mxu0 0.0
    %257 = vmatmul.mubr.f32.gmra.mxu0 %v117
    %v258 = vpop.f32.mrf.mxu0
    %v259 = vadd.f32 0.0, %v258
    %v260 = vpop.f32.mrf.mxu0
    %261 = vmatprep.mubr.f32.mxu0 0.0
    %262 = vmatmul.mubr.f32.gmra.mxu0 %v120
    %v263 = vpop.f32.mrf.mxu0
    %v264 = vadd.f32 0.0, %v263
    %v265 = vpop.f32.mrf.mxu0
    %266 = vdwg.mxu0
    %v268 = vsel %vm73, %v54, 0
    %270 = vmatprep.subr.mxu0 0.0
    %271 = vmatpush1.msra.mxu0 0.0
    %272 = vmatprep.subr.mxu0 0.0
    %273 = vmatpush1.msra.mxu0 0.0
    %274 = vmatprep.subr.mxu0 0.0
    %275 = vmatpush1.msra.mxu0 0.0
    %276 = vmatprep.subr.mxu0 0.0
    %277 = vmatpush1.msra.mxu0 0.0
    %278 = vmatprep.subr.mxu0 0.0
    %279 = vmatpush1.msra.mxu0 0.0
    %280 = vmatprep.subr.mxu0 0.0
    %281 = vmatpush1.msra.mxu0 0.0
    %282 = vmatprep.subr.mxu0 0.0
    %283 = vmatpush1.msra.mxu0 0.0
    %284 = vmatprep.subr.mxu0 0.0
    %285 = vmatpush1.msra.mxu0 0.0
    %286 = vmatprep.subr.mxu0 0.0
    %287 = vmatpush1.msra.mxu0 0.0
    %288 = vmatprep.subr.mxu0 0.0
    %289 = vmatpush1.msra.mxu0 0.0
    %290 = vmatprep.subr.mxu0 0.0
    %291 = vmatpush1.msra.mxu0 0.0
    %292 = vmatprep.subr.mxu0 0.0
    %293 = vmatpush1.msra.mxu0 0.0
    %294 = vmatprep.subr.mxu0 0.0
    %295 = vmatpush1.msra.mxu0 0.0
    %296 = vmatprep.subr.mxu0 0.0
    %297 = vmatpush1.msra.mxu0 0.0
    %298 = vmatprep.subr.mxu0 0.0
    %299 = vmatpush1.msra.mxu0 %v194
    %300 = vmatprep.subr.mxu0 0.0
    %301 = vmatpush1.msra.mxu0 %v189
    %302 = vmatprep.subr.mxu0 0.0
    %303 = vmatpush2.msra.mxu0 0.0
    %304 = vmatprep.subr.mxu0 0.0
    %305 = vmatpush2.msra.mxu0 0.0
    %306 = vmatprep.subr.mxu0 0.0
    %307 = vmatpush2.msra.mxu0 0.0
    %308 = vmatprep.subr.mxu0 0.0
    %309 = vmatpush2.msra.mxu0 0.0
    %310 = vmatprep.subr.mxu0 0.0
    %311 = vmatpush2.msra.mxu0 0.0
    %312 = vmatprep.subr.mxu0 0.0
    %313 = vmatpush2.msra.mxu0 0.0
    %314 = vmatprep.subr.mxu0 0.0
    %315 = vmatpush2.msra.mxu0 0.0
    %316 = vmatprep.subr.mxu0 0.0
    %317 = vmatpush2.msra.mxu0 0.0
    %318 = vmatprep.subr.mxu0 0.0
    %319 = vmatpush2.msra.mxu0 0.0
    %320 = vmatprep.subr.mxu0 0.0
    %321 = vmatpush2.msra.mxu0 0.0
    %322 = vmatprep.subr.mxu0 0.0
    %323 = vmatpush2.msra.mxu0 0.0
    %324 = vmatprep.subr.mxu0 0.0
    %325 = vmatpush2.msra.mxu0 0.0
    %326 = vmatprep.subr.mxu0 0.0
    %327 = vmatpush2.msra.mxu0 0.0
    %328 = vmatprep.subr.mxu0 0.0
    %329 = vmatpush2.msra.mxu0 0.0
    %330 = vmatprep.subr.mxu0 0.0
    %331 = vmatpush2.msra.mxu0 0.0
    %332 = vmatprep.subr.mxu0 0.0
    %333 = vmatpush2.msra.mxu0 0.0
    %334 = vmatprep.mubr.f32.mxu0 0.0
    %335 = vmatmul.mubr.f32.gmra.mxu0 %v268
    %v336 = vpop.f32.mrf.mxu0
    %v337 = vadd.f32 0.0, %v336
    %v338 = vpop.f32.mrf.mxu0
    %339 = vdwg.mxu0
    %340 = vmatprep.subr.mxu0 0.0
    %341 = vmatpush1.msra.mxu0 0.0
    %342 = vmatprep.subr.mxu0 0.0
    %343 = vmatpush1.msra.mxu0 0.0
    %344 = vmatprep.subr.mxu0 0.0
    %345 = vmatpush1.msra.mxu0 0.0
    %346 = vmatprep.subr.mxu0 0.0
    %347 = vmatpush1.msra.mxu0 0.0
    %348 = vmatprep.subr.mxu0 0.0
    %349 = vmatpush1.msra.mxu0 0.0
    %350 = vmatprep.subr.mxu0 0.0
    %351 = vmatpush1.msra.mxu0 0.0
    %352 = vmatprep.subr.mxu0 0.0
    %353 = vmatpush1.msra.mxu0 0.0
    %354 = vmatprep.subr.mxu0 0.0
    %355 = vmatpush1.msra.mxu0 0.0
    %356 = vmatprep.subr.mxu0 0.0
    %357 = vmatpush1.msra.mxu0 0.0
    %358 = vmatprep.subr.mxu0 0.0
    %359 = vmatpush1.msra.mxu0 0.0
    %360 = vmatprep.subr.mxu0 0.0
    %361 = vmatpush1.msra.mxu0 0.0
    %362 = vmatprep.subr.mxu0 0.0
    %363 = vmatpush1.msra.mxu0 0.0
    %364 = vmatprep.subr.mxu0 0.0
    %365 = vmatpush1.msra.mxu0 0.0
    %366 = vmatprep.subr.mxu0 0.0
    %367 = vmatpush1.msra.mxu0 0.0
    %368 = vmatprep.subr.mxu0 0.0
    %369 = vmatpush1.msra.mxu0 %v204
    %370 = vmatprep.subr.mxu0 0.0
    %371 = vmatpush1.msra.mxu0 %v199
    %372 = vmatprep.subr.mxu0 0.0
    %373 = vmatpush2.msra.mxu0 0.0
    %374 = vmatprep.subr.mxu0 0.0
    %375 = vmatpush2.msra.mxu0 0.0
    %376 = vmatprep.subr.mxu0 0.0
    %377 = vmatpush2.msra.mxu0 0.0
    %378 = vmatprep.subr.mxu0 0.0
    %379 = vmatpush2.msra.mxu0 0.0
    %380 = vmatprep.subr.mxu0 0.0
    %381 = vmatpush2.msra.mxu0 0.0
    %382 = vmatprep.subr.mxu0 0.0
    %383 = vmatpush2.msra.mxu0 0.0
    %384 = vmatprep.subr.mxu0 0.0
    %385 = vmatpush2.msra.mxu0 0.0
    %386 = vmatprep.subr.mxu0 0.0
    %387 = vmatpush2.msra.mxu0 0.0
    %388 = vmatprep.subr.mxu0 0.0
    %389 = vmatpush2.msra.mxu0 0.0
    %390 = vmatprep.subr.mxu0 0.0
    %391 = vmatpush2.msra.mxu0 0.0
    %392 = vmatprep.subr.mxu0 0.0
    %393 = vmatpush2.msra.mxu0 0.0
    %394 = vmatprep.subr.mxu0 0.0
    %395 = vmatpush2.msra.mxu0 0.0
    %396 = vmatprep.subr.mxu0 0.0
    %397 = vmatpush2.msra.mxu0 0.0
    %398 = vmatprep.subr.mxu0 0.0
    %399 = vmatpush2.msra.mxu0 0.0
    %400 = vmatprep.subr.mxu0 0.0
    %401 = vmatpush2.msra.mxu0 0.0
    %402 = vmatprep.subr.mxu0 0.0
    %403 = vmatpush2.msra.mxu0 0.0
    %404 = vmatprep.mubr.f32.mxu0 0.0
    %405 = vmatmul.mubr.f32.gmra.mxu0 %v268
    %v406 = vpop.f32.mrf.mxu0
    %v407 = vadd.f32 0.0, %v406
    %v408 = vpop.f32.mrf.mxu0
    %409 = vdwg.mxu0
    %410 = vmatprep.subr.mxu0 0.0
    %411 = vmatpush1.msra.mxu0 0.0
    %412 = vmatprep.subr.mxu0 0.0
    %413 = vmatpush1.msra.mxu0 0.0
    %414 = vmatprep.subr.mxu0 0.0
    %415 = vmatpush1.msra.mxu0 0.0
    %416 = vmatprep.subr.mxu0 0.0
    %417 = vmatpush1.msra.mxu0 0.0
    %418 = vmatprep.subr.mxu0 0.0
    %419 = vmatpush1.msra.mxu0 0.0
    %420 = vmatprep.subr.mxu0 0.0
    %421 = vmatpush1.msra.mxu0 0.0
    %422 = vmatprep.subr.mxu0 0.0
    %423 = vmatpush1.msra.mxu0 0.0
    %424 = vmatprep.subr.mxu0 0.0
    %425 = vmatpush1.msra.mxu0 0.0
    %426 = vmatprep.subr.mxu0 0.0
    %427 = vmatpush1.msra.mxu0 0.0
    %428 = vmatprep.subr.mxu0 0.0
    %429 = vmatpush1.msra.mxu0 0.0
    %430 = vmatprep.subr.mxu0 0.0
    %431 = vmatpush1.msra.mxu0 0.0
    %432 = vmatprep.subr.mxu0 0.0
    %433 = vmatpush1.msra.mxu0 0.0
    %434 = vmatprep.subr.mxu0 0.0
    %435 = vmatpush1.msra.mxu0 0.0
    %436 = vmatprep.subr.mxu0 0.0
    %437 = vmatpush1.msra.mxu0 0.0
    %438 = vmatprep.subr.mxu0 0.0
    %439 = vmatpush1.msra.mxu0 %v214
    %440 = vmatprep.subr.mxu0 0.0
    %441 = vmatpush1.msra.mxu0 %v209
    %442 = vmatprep.subr.mxu0 0.0
    %443 = vmatpush2.msra.mxu0 0.0
    %444 = vmatprep.subr.mxu0 0.0
    %445 = vmatpush2.msra.mxu0 0.0
    %446 = vmatprep.subr.mxu0 0.0
    %447 = vmatpush2.msra.mxu0 0.0
    %448 = vmatprep.subr.mxu0 0.0
    %449 = vmatpush2.msra.mxu0 0.0
    %450 = vmatprep.subr.mxu0 0.0
    %451 = vmatpush2.msra.mxu0 0.0
    %452 = vmatprep.subr.mxu0 0.0
    %453 = vmatpush2.msra.mxu0 0.0
    %454 = vmatprep.subr.mxu0 0.0
    %455 = vmatpush2.msra.mxu0 0.0
    %456 = vmatprep.subr.mxu0 0.0
    %457 = vmatpush2.msra.mxu0 0.0
    %458 = vmatprep.subr.mxu0 0.0
    %459 = vmatpush2.msra.mxu0 0.0
    %460 = vmatprep.subr.mxu0 0.0
    %461 = vmatpush2.msra.mxu0 0.0
    %462 = vmatprep.subr.mxu0 0.0
    %463 = vmatpush2.msra.mxu0 0.0
    %464 = vmatprep.subr.mxu0 0.0
    %465 = vmatpush2.msra.mxu0 0.0
    %466 = vmatprep.subr.mxu0 0.0
    %467 = vmatpush2.msra.mxu0 0.0
    %468 = vmatprep.subr.mxu0 0.0
    %469 = vmatpush2.msra.mxu0 0.0
    %470 = vmatprep.subr.mxu0 0.0
    %471 = vmatpush2.msra.mxu0 0.0
    %472 = vmatprep.subr.mxu0 0.0
    %473 = vmatpush2.msra.mxu0 0.0
    %474 = vmatprep.mubr.f32.mxu0 0.0
    %475 = vmatmul.mubr.f32.gmra.mxu0 %v268
    %v476 = vpop.f32.mrf.mxu0
    %v477 = vadd.f32 0.0, %v476
    %v478 = vpop.f32.mrf.mxu0
    %479 = vdwg.mxu0
    %480 = vmatprep.subr.mxu0 0.0
    %481 = vmatpush1.msra.mxu0 0.0
    %482 = vmatprep.subr.mxu0 0.0
    %483 = vmatpush1.msra.mxu0 0.0
    %484 = vmatprep.subr.mxu0 0.0
    %485 = vmatpush1.msra.mxu0 0.0
    %486 = vmatprep.subr.mxu0 0.0
    %487 = vmatpush1.msra.mxu0 0.0
    %488 = vmatprep.subr.mxu0 0.0
    %489 = vmatpush1.msra.mxu0 0.0
    %490 = vmatprep.subr.mxu0 0.0
    %491 = vmatpush1.msra.mxu0 0.0
    %492 = vmatprep.subr.mxu0 0.0
    %493 = vmatpush1.msra.mxu0 0.0
    %494 = vmatprep.subr.mxu0 0.0
    %495 = vmatpush1.msra.mxu0 0.0
    %496 = vmatprep.subr.mxu0 0.0
    %497 = vmatpush1.msra.mxu0 0.0
    %498 = vmatprep.subr.mxu0 0.0
    %499 = vmatpush1.msra.mxu0 0.0
    %500 = vmatprep.subr.mxu0 0.0
    %501 = vmatpush1.msra.mxu0 0.0
    %502 = vmatprep.subr.mxu0 0.0
    %503 = vmatpush1.msra.mxu0 0.0
    %504 = vmatprep.subr.mxu0 0.0
    %505 = vmatpush1.msra.mxu0 0.0
    %506 = vmatprep.subr.mxu0 0.0
    %507 = vmatpush1.msra.mxu0 0.0
    %508 = vmatprep.subr.mxu0 0.0
    %509 = vmatpush1.msra.mxu0 %v224
    %510 = vmatprep.subr.mxu0 0.0
    %511 = vmatpush1.msra.mxu0 %v219
    %512 = vmatprep.subr.mxu0 0.0
    %513 = vmatpush2.msra.mxu0 0.0
    %514 = vmatprep.subr.mxu0 0.0
    %515 = vmatpush2.msra.mxu0 0.0
    %516 = vmatprep.subr.mxu0 0.0
    %517 = vmatpush2.msra.mxu0 0.0
    %518 = vmatprep.subr.mxu0 0.0
    %519 = vmatpush2.msra.mxu0 0.0
    %520 = vmatprep.subr.mxu0 0.0
    %521 = vmatpush2.msra.mxu0 0.0
    %522 = vmatprep.subr.mxu0 0.0
    %523 = vmatpush2.msra.mxu0 0.0
    %524 = vmatprep.subr.mxu0 0.0
    %525 = vmatpush2.msra.mxu0 0.0
    %526 = vmatprep.subr.mxu0 0.0
    %527 = vmatpush2.msra.mxu0 0.0
    %528 = vmatprep.subr.mxu0 0.0
    %529 = vmatpush2.msra.mxu0 0.0
    %530 = vmatprep.subr.mxu0 0.0
    %531 = vmatpush2.msra.mxu0 0.0
    %532 = vmatprep.subr.mxu0 0.0
    %533 = vmatpush2.msra.mxu0 0.0
    %534 = vmatprep.subr.mxu0 0.0
    %535 = vmatpush2.msra.mxu0 0.0
    %536 = vmatprep.subr.mxu0 0.0
    %537 = vmatpush2.msra.mxu0 0.0
    %538 = vmatprep.subr.mxu0 0.0
    %539 = vmatpush2.msra.mxu0 0.0
    %540 = vmatprep.subr.mxu0 0.0
    %541 = vmatpush2.msra.mxu0 0.0
    %542 = vmatprep.subr.mxu0 0.0
    %543 = vmatpush2.msra.mxu0 0.0
    %544 = vmatprep.mubr.f32.mxu0 0.0
    %545 = vmatmul.mubr.f32.gmra.mxu0 %v268
    %v546 = vpop.f32.mrf.mxu0
    %v547 = vadd.f32 0.0, %v546
    %v548 = vpop.f32.mrf.mxu0
    %549 = vdwg.mxu0
    %550 = vmatprep.subr.mxu0 0.0
    %551 = vmatpush1.msra.mxu0 0.0
    %552 = vmatprep.subr.mxu0 0.0
    %553 = vmatpush1.msra.mxu0 0.0
    %554 = vmatprep.subr.mxu0 0.0
    %555 = vmatpush1.msra.mxu0 0.0
    %556 = vmatprep.subr.mxu0 0.0
    %557 = vmatpush1.msra.mxu0 0.0
    %558 = vmatprep.subr.mxu0 0.0
    %559 = vmatpush1.msra.mxu0 0.0
    %560 = vmatprep.subr.mxu0 0.0
    %561 = vmatpush1.msra.mxu0 0.0
    %562 = vmatprep.subr.mxu0 0.0
    %563 = vmatpush1.msra.mxu0 0.0
    %564 = vmatprep.subr.mxu0 0.0
    %565 = vmatpush1.msra.mxu0 0.0
    %566 = vmatprep.subr.mxu0 0.0
    %567 = vmatpush1.msra.mxu0 0.0
    %568 = vmatprep.subr.mxu0 0.0
    %569 = vmatpush1.msra.mxu0 0.0
    %570 = vmatprep.subr.mxu0 0.0
    %571 = vmatpush1.msra.mxu0 0.0
    %572 = vmatprep.subr.mxu0 0.0
    %573 = vmatpush1.msra.mxu0 0.0
    %574 = vmatprep.subr.mxu0 0.0
    %575 = vmatpush1.msra.mxu0 0.0
    %576 = vmatprep.subr.mxu0 0.0
    %577 = vmatpush1.msra.mxu0 0.0
    %578 = vmatprep.subr.mxu0 0.0
    %579 = vmatpush1.msra.mxu0 %v234
    %580 = vmatprep.subr.mxu0 0.0
    %581 = vmatpush1.msra.mxu0 %v229
    %582 = vmatprep.subr.mxu0 0.0
    %583 = vmatpush2.msra.mxu0 0.0
    %584 = vmatprep.subr.mxu0 0.0
    %585 = vmatpush2.msra.mxu0 0.0
    %586 = vmatprep.subr.mxu0 0.0
    %587 = vmatpush2.msra.mxu0 0.0
    %588 = vmatprep.subr.mxu0 0.0
    %589 = vmatpush2.msra.mxu0 0.0
    %590 = vmatprep.subr.mxu0 0.0
    %591 = vmatpush2.msra.mxu0 0.0
    %592 = vmatprep.subr.mxu0 0.0
    %593 = vmatpush2.msra.mxu0 0.0
    %594 = vmatprep.subr.mxu0 0.0
    %595 = vmatpush2.msra.mxu0 0.0
    %596 = vmatprep.subr.mxu0 0.0
    %597 = vmatpush2.msra.mxu0 0.0
    %598 = vmatprep.subr.mxu0 0.0
    %599 = vmatpush2.msra.mxu0 0.0
    %600 = vmatprep.subr.mxu0 0.0
    %601 = vmatpush2.msra.mxu0 0.0
    %602 = vmatprep.subr.mxu0 0.0
    %603 = vmatpush2.msra.mxu0 0.0
    %604 = vmatprep.subr.mxu0 0.0
    %605 = vmatpush2.msra.mxu0 0.0
    %606 = vmatprep.subr.mxu0 0.0
    %607 = vmatpush2.msra.mxu0 0.0
    %608 = vmatprep.subr.mxu0 0.0
    %609 = vmatpush2.msra.mxu0 0.0
    %610 = vmatprep.subr.mxu0 0.0
    %611 = vmatpush2.msra.mxu0 0.0
    %612 = vmatprep.subr.mxu0 0.0
    %613 = vmatpush2.msra.mxu0 0.0
    %614 = vmatprep.mubr.f32.mxu0 0.0
    %615 = vmatmul.mubr.f32.gmra.mxu0 %v268
    %v616 = vpop.f32.mrf.mxu0
    %v617 = vadd.f32 0.0, %v616
    %v618 = vpop.f32.mrf.mxu0
    %619 = vdwg.mxu0
    %620 = vmatprep.subr.mxu0 0.0
    %621 = vmatpush1.msra.mxu0 0.0
    %622 = vmatprep.subr.mxu0 0.0
    %623 = vmatpush1.msra.mxu0 0.0
    %624 = vmatprep.subr.mxu0 0.0
    %625 = vmatpush1.msra.mxu0 0.0
    %626 = vmatprep.subr.mxu0 0.0
    %627 = vmatpush1.msra.mxu0 0.0
    %628 = vmatprep.subr.mxu0 0.0
    %629 = vmatpush1.msra.mxu0 0.0
    %630 = vmatprep.subr.mxu0 0.0
    %631 = vmatpush1.msra.mxu0 0.0
    %632 = vmatprep.subr.mxu0 0.0
    %633 = vmatpush1.msra.mxu0 0.0
    %634 = vmatprep.subr.mxu0 0.0
    %635 = vmatpush1.msra.mxu0 0.0
    %636 = vmatprep.subr.mxu0 0.0
    %637 = vmatpush1.msra.mxu0 0.0
    %638 = vmatprep.subr.mxu0 0.0
    %639 = vmatpush1.msra.mxu0 0.0
    %640 = vmatprep.subr.mxu0 0.0
    %641 = vmatpush1.msra.mxu0 0.0
    %642 = vmatprep.subr.mxu0 0.0
    %643 = vmatpush1.msra.mxu0 0.0
    %644 = vmatprep.subr.mxu0 0.0
    %645 = vmatpush1.msra.mxu0 0.0
    %646 = vmatprep.subr.mxu0 0.0
    %647 = vmatpush1.msra.mxu0 0.0
    %648 = vmatprep.subr.mxu0 0.0
    %649 = vmatpush1.msra.mxu0 %v244
    %650 = vmatprep.subr.mxu0 0.0
    %651 = vmatpush1.msra.mxu0 %v239
    %652 = vmatprep.subr.mxu0 0.0
    %653 = vmatpush2.msra.mxu0 0.0
    %654 = vmatprep.subr.mxu0 0.0
    %655 = vmatpush2.msra.mxu0 0.0
    %656 = vmatprep.subr.mxu0 0.0
    %657 = vmatpush2.msra.mxu0 0.0
    %658 = vmatprep.subr.mxu0 0.0
    %659 = vmatpush2.msra.mxu0 0.0
    %660 = vmatprep.subr.mxu0 0.0
    %661 = vmatpush2.msra.mxu0 0.0
    %662 = vmatprep.subr.mxu0 0.0
    %663 = vmatpush2.msra.mxu0 0.0
    %664 = vmatprep.subr.mxu0 0.0
    %665 = vmatpush2.msra.mxu0 0.0
    %666 = vmatprep.subr.mxu0 0.0
    %667 = vmatpush2.msra.mxu0 0.0
    %668 = vmatprep.subr.mxu0 0.0
    %669 = vmatpush2.msra.mxu0 0.0
    %670 = vmatprep.subr.mxu0 0.0
    %671 = vmatpush2.msra.mxu0 0.0
    %672 = vmatprep.subr.mxu0 0.0
    %673 = vmatpush2.msra.mxu0 0.0
    %674 = vmatprep.subr.mxu0 0.0
    %675 = vmatpush2.msra.mxu0 0.0
    %676 = vmatprep.subr.mxu0 0.0
    %677 = vmatpush2.msra.mxu0 0.0
    %678 = vmatprep.subr.mxu0 0.0
    %679 = vmatpush2.msra.mxu0 0.0
    %680 = vmatprep.subr.mxu0 0.0
    %681 = vmatpush2.msra.mxu0 0.0
    %682 = vmatprep.subr.mxu0 0.0
    %683 = vmatpush2.msra.mxu0 0.0
    %684 = vmatprep.mubr.f32.mxu0 0.0
    %685 = vmatmul.mubr.f32.gmra.mxu0 %v268
    %v686 = vpop.f32.mrf.mxu0
    %v687 = vadd.f32 0.0, %v686
    %v688 = vpop.f32.mrf.mxu0
    %689 = vdwg.mxu0
    %690 = vmatprep.subr.mxu0 0.0
    %691 = vmatpush1.msra.mxu0 0.0
    %692 = vmatprep.subr.mxu0 0.0
    %693 = vmatpush1.msra.mxu0 0.0
    %694 = vmatprep.subr.mxu0 0.0
    %695 = vmatpush1.msra.mxu0 0.0
    %696 = vmatprep.subr.mxu0 0.0
    %697 = vmatpush1.msra.mxu0 0.0
    %698 = vmatprep.subr.mxu0 0.0
    %699 = vmatpush1.msra.mxu0 0.0
    %700 = vmatprep.subr.mxu0 0.0
    %701 = vmatpush1.msra.mxu0 0.0
    %702 = vmatprep.subr.mxu0 0.0
    %703 = vmatpush1.msra.mxu0 0.0
    %704 = vmatprep.subr.mxu0 0.0
    %705 = vmatpush1.msra.mxu0 0.0
    %706 = vmatprep.subr.mxu0 0.0
    %707 = vmatpush1.msra.mxu0 0.0
    %708 = vmatprep.subr.mxu0 0.0
    %709 = vmatpush1.msra.mxu0 0.0
    %710 = vmatprep.subr.mxu0 0.0
    %711 = vmatpush1.msra.mxu0 0.0
    %712 = vmatprep.subr.mxu0 0.0
    %713 = vmatpush1.msra.mxu0 0.0
    %714 = vmatprep.subr.mxu0 0.0
    %715 = vmatpush1.msra.mxu0 0.0
    %716 = vmatprep.subr.mxu0 0.0
    %717 = vmatpush1.msra.mxu0 0.0
    %718 = vmatprep.subr.mxu0 0.0
    %719 = vmatpush1.msra.mxu0 %v254
    %720 = vmatprep.subr.mxu0 0.0
    %721 = vmatpush1.msra.mxu0 %v249
    %722 = vmatprep.subr.mxu0 0.0
    %723 = vmatpush2.msra.mxu0 0.0
    %724 = vmatprep.subr.mxu0 0.0
    %725 = vmatpush2.msra.mxu0 0.0
    %726 = vmatprep.subr.mxu0 0.0
    %727 = vmatpush2.msra.mxu0 0.0
    %728 = vmatprep.subr.mxu0 0.0
    %729 = vmatpush2.msra.mxu0 0.0
    %730 = vmatprep.subr.mxu0 0.0
    %731 = vmatpush2.msra.mxu0 0.0
    %732 = vmatprep.subr.mxu0 0.0
    %733 = vmatpush2.msra.mxu0 0.0
    %734 = vmatprep.subr.mxu0 0.0
    %735 = vmatpush2.msra.mxu0 0.0
    %736 = vmatprep.subr.mxu0 0.0
    %737 = vmatpush2.msra.mxu0 0.0
    %738 = vmatprep.subr.mxu0 0.0
    %739 = vmatpush2.msra.mxu0 0.0
    %740 = vmatprep.subr.mxu0 0.0
    %741 = vmatpush2.msra.mxu0 0.0
    %742 = vmatprep.subr.mxu0 0.0
    %743 = vmatpush2.msra.mxu0 0.0
    %744 = vmatprep.subr.mxu0 0.0
    %745 = vmatpush2.msra.mxu0 0.0
    %746 = vmatprep.subr.mxu0 0.0
    %747 = vmatpush2.msra.mxu0 0.0
    %748 = vmatprep.subr.mxu0 0.0
    %749 = vmatpush2.msra.mxu0 0.0
    %750 = vmatprep.subr.mxu0 0.0
    %751 = vmatpush2.msra.mxu0 0.0
    %752 = vmatprep.subr.mxu0 0.0
    %753 = vmatpush2.msra.mxu0 0.0
    %754 = vmatprep.mubr.f32.mxu0 0.0
    %755 = vmatmul.mubr.f32.gmra.mxu0 %v268
    %v756 = vpop.f32.mrf.mxu0
    %v757 = vadd.f32 0.0, %v756
    %v758 = vpop.f32.mrf.mxu0
    %759 = vdwg.mxu0
    %760 = vmatprep.subr.mxu0 0.0
    %761 = vmatpush1.msra.mxu0 0.0
    %762 = vmatprep.subr.mxu0 0.0
    %763 = vmatpush1.msra.mxu0 0.0
    %764 = vmatprep.subr.mxu0 0.0
    %765 = vmatpush1.msra.mxu0 0.0
    %766 = vmatprep.subr.mxu0 0.0
    %767 = vmatpush1.msra.mxu0 0.0
    %768 = vmatprep.subr.mxu0 0.0
    %769 = vmatpush1.msra.mxu0 0.0
    %770 = vmatprep.subr.mxu0 0.0
    %771 = vmatpush1.msra.mxu0 0.0
    %772 = vmatprep.subr.mxu0 0.0
    %773 = vmatpush1.msra.mxu0 0.0
    %774 = vmatprep.subr.mxu0 0.0
    %775 = vmatpush1.msra.mxu0 0.0
    %776 = vmatprep.subr.mxu0 0.0
    %777 = vmatpush1.msra.mxu0 0.0
    %778 = vmatprep.subr.mxu0 0.0
    %779 = vmatpush1.msra.mxu0 0.0
    %780 = vmatprep.subr.mxu0 0.0
    %781 = vmatpush1.msra.mxu0 0.0
    %782 = vmatprep.subr.mxu0 0.0
    %783 = vmatpush1.msra.mxu0 0.0
    %784 = vmatprep.subr.mxu0 0.0
    %785 = vmatpush1.msra.mxu0 0.0
    %786 = vmatprep.subr.mxu0 0.0
    %787 = vmatpush1.msra.mxu0 0.0
    %788 = vmatprep.subr.mxu0 0.0
    %789 = vmatpush1.msra.mxu0 %v264
    %790 = vmatprep.subr.mxu0 0.0
    %791 = vmatpush1.msra.mxu0 %v259
    %792 = vmatprep.subr.mxu0 0.0
    %793 = vmatpush2.msra.mxu0 0.0
    %794 = vmatprep.subr.mxu0 0.0
    %795 = vmatpush2.msra.mxu0 0.0
    %796 = vmatprep.subr.mxu0 0.0
    %797 = vmatpush2.msra.mxu0 0.0
    %798 = vmatprep.subr.mxu0 0.0
    %799 = vmatpush2.msra.mxu0 0.0
    %800 = vmatprep.subr.mxu0 0.0
    %801 = vmatpush2.msra.mxu0 0.0
    %802 = vmatprep.subr.mxu0 0.0
    %803 = vmatpush2.msra.mxu0 0.0
    %804 = vmatprep.subr.mxu0 0.0
    %805 = vmatpush2.msra.mxu0 0.0
    %806 = vmatprep.subr.mxu0 0.0
    %807 = vmatpush2.msra.mxu0 0.0
    %808 = vmatprep.subr.mxu0 0.0
    %809 = vmatpush2.msra.mxu0 0.0
    %810 = vmatprep.subr.mxu0 0.0
    %811 = vmatpush2.msra.mxu0 0.0
    %812 = vmatprep.subr.mxu0 0.0
    %813 = vmatpush2.msra.mxu0 0.0
    %814 = vmatprep.subr.mxu0 0.0
    %815 = vmatpush2.msra.mxu0 0.0
    %816 = vmatprep.subr.mxu0 0.0
    %817 = vmatpush2.msra.mxu0 0.0
    %818 = vmatprep.subr.mxu0 0.0
    %819 = vmatpush2.msra.mxu0 0.0
    %820 = vmatprep.subr.mxu0 0.0
    %821 = vmatpush2.msra.mxu0 0.0
    %822 = vmatprep.subr.mxu0 0.0
    %823 = vmatpush2.msra.mxu0 0.0
    %824 = vmatprep.mubr.f32.mxu0 0.0
    %825 = vmatmul.mubr.f32.gmra.mxu0 %v268
    %v826 = vpop.f32.mrf.mxu0
    %v827 = vadd.f32 0.0, %v826
    %v828 = vpop.f32.mrf.mxu0
    %829 = vdwg.mxu0
    %v830 = vmul.f32 %v337, 0.012345679
    %v831 = vmul.f32 %v407, 0.012345679
    %v832 = vmul.f32 %v477, 0.012345679
    %v833 = vmul.f32 %v547, 0.012345679
    %v834 = vmul.f32 %v617, 0.012345679
    %v835 = vmul.f32 %v687, 0.012345679
    %v836 = vmul.f32 %v757, 0.012345679
    %v837 = vmul.f32 %v827, 0.012345679
    %vm838 = vcmask 27648
    %839 = vst.msk [vmem:[#allocation8] sm:$0xf] %vm838, %v830
    %840 = vst.msk [vmem:[#allocation8 + $0x4] sm:$0xf] %vm838, %v831
    %841 = vst.msk [vmem:[#allocation8 + $0x8] sm:$0xf] %vm838, %v832
    %842 = vst.msk [vmem:[#allocation8 + $0xc] sm:$0xf] %vm838, %v833
    %843 = vst.msk [vmem:[#allocation8 + $0x10] sm:$0xf] %vm838, %v834
    %844 = vst.msk [vmem:[#allocation8 + $0x14] sm:$0xf] %vm838, %v835
    %845 = vst.msk [vmem:[#allocation8 + $0x18] sm:$0xf] %vm838, %v836
    %846 = vst.msk [vmem:[#allocation8 + $0x1c] sm:$0xf] %vm838, %v837
    // Predicated region
    $region26: #{_lambda_.1} parent=1 // pred_check
      _
    $region27: #{_lambda_.1} parent=1 // pred_check_branch
      %848 = sbr.rel (0) target = $region29
    $region28: #{_lambda_.1} parent=1 // pred_region
      %s850 = ssub.s32 512, 512
      %851 = vsyncadd [#allocation4], %s850
      %s852 = sshll.u32 [#allocation8], 4
      %s853 = int_to_ptr.vmem [resolvable:$true] %s852
      %858 = dma.vmem_to_hbm [thread:$0]  %s853, 512, %s3, [#allocation4], 64, 64, 4
    $region29: #{_lambda_.1} parent=1 // pred_fallthru
      _
    // Predicated region
    $region30: #{_lambda_.1} parent=1 // pred_check
      _
    $region31: #{_lambda_.1} parent=1 // pred_check_branch
      %860 = sbr.rel (0) target = $region33
    $region32: #{_lambda_.1} parent=1 // pred_region
      %861 = dma.done [#allocation4], 512
    $region33: #{_lambda_.1} parent=1 // pred_fallthru
      _
    %862 = vsyncpa [#allocation3], 1
    %863 = vsyncpa [#allocation6], 1
    %864 = vsyncpa [#allocation4], 1

</llo_original>
